<compile_context>
chip_gen: v7x
topology: tpu7x:2x2x1
jax: 0.10.0
libtpu: 0.0.40
codegen_flags: <defaults>
</compile_context>

<pallas_src>
import jax
import jax.numpy as jnp
from jax.experimental import pallas as pl
from jax.experimental.pallas import tpu as pltpu


def _gated_kernel_c1(x_ref, wab_ref, bab_ref, wc_ref, bc_ref, out_ref):
    """n_classes == 1: final projection as VPU multiply + cross-lane reduce."""
    d = wc_ref.shape[-1]
    # Fused (Wa || Wb) matmul, f32 accumulation on the MXU.
    pre = (jnp.dot(x_ref[...], wab_ref[...],
                   preferred_element_type=jnp.float32) + bab_ref[...])
    a = jnp.tanh(pre[:, :d])
    b = jax.nn.sigmoid(pre[:, d:])
    g = a * b                                              # (tile, D) f32
    out = jnp.sum(g * wc_ref[...], axis=-1, keepdims=True) + bc_ref[...]
    out_ref[...] = out.astype(out_ref.dtype)


def _gated_kernel_cn(x_ref, wab_ref, bab_ref, wc_ref, bc_ref, out_ref):
    """General n_classes: final projection on the MXU."""
    d = wc_ref.shape[0]
    pre = (jnp.dot(x_ref[...], wab_ref[...],
                   preferred_element_type=jnp.float32) + bab_ref[...])
    a = jnp.tanh(pre[:, :d])
    b = jax.nn.sigmoid(pre[:, d:])
    g = (a * b).astype(wc_ref.dtype)
    out = (jnp.dot(g, wc_ref[...], preferred_element_type=jnp.float32)
           + bc_ref[...])
    out_ref[...] = out.astype(out_ref.dtype)


def _round_up(x, m):
    return ((x + m - 1) // m) * m


def attn_net_gated(x, wa, ba, wb, bb, wc, bc, *, tile_n=512, use_bf16=True):
    """Pallas forward of Attn_Net_Gated. Returns (A, x).

    x      : (N, L)  tokens x features
    wa, wb : (L, D)  Linear weights pre-transposed (torch stores (D, L))
    ba, bb : (D,)
    wc     : (D, C)  pre-transposed; bc : (C,)
    """
    N, L = x.shape
    D = wa.shape[1]
    C = wc.shape[1]

    out_dtype = x.dtype
    mm_dtype = jnp.bfloat16 if use_bf16 else x.dtype

    # Row-tile selection: big tiles amortize per-grid-step overhead; clamp to
    # (padded) N for small inputs; keep a multiple of 8 sublanes.
    tile = max(8, min(int(tile_n), _round_up(N, 8)))
    tile = _round_up(tile, 8)
    n_tiles = pl.cdiv(N, tile)
    n_pad = n_tiles * tile

    # Fused gating weights: one MXU pass computes both pre-activations.
    wab = jnp.concatenate([wa, wb], axis=1).astype(mm_dtype)        # (L, 2D)
    bab = jnp.concatenate(
        [ba.reshape(1, D), bb.reshape(1, D)], axis=1).astype(jnp.float32)

    x_p = x.astype(mm_dtype)
    if n_pad != N:
        # Padded rows produce garbage that is sliced off below (no NaNs: zeros
        # through tanh/sigmoid are finite), so no masking is required.
        x_p = jnp.pad(x_p, ((0, n_pad - N), (0, 0)))

    bc_row = bc.reshape(1, C).astype(jnp.float32)
    if C == 1:
        kernel = _gated_kernel_c1
        wc_arg = wc.reshape(1, D).astype(jnp.float32)   # row vector for VPU
        wc_block = (1, D)
    else:
        kernel = _gated_kernel_cn
        wc_arg = wc.astype(mm_dtype)
        wc_block = (D, C)

    # NOTE: weight/bias index_maps are constant (-> (0, 0)), so Pallas DMAs
    # them only once; their double-buffer VMEM footprint is tiny at these
    # sizes (could be halved with pipeline_mode=pl.Buffered(1) if L*D grows).
    a_out = pl.pallas_call(
        kernel,
        out_shape=jax.ShapeDtypeStruct((n_pad, C), out_dtype),
        grid_spec=pltpu.PrefetchScalarGridSpec(
            num_scalar_prefetch=0,
            grid=(n_tiles,),
            in_specs=[
                pl.BlockSpec((tile, L), lambda i: (i, 0)),     # x row tile
                pl.BlockSpec((L, 2 * D), lambda i: (0, 0)),    # Wa || Wb
                pl.BlockSpec((1, 2 * D), lambda i: (0, 0)),    # ba || bb
                pl.BlockSpec(wc_block, lambda i: (0, 0)),      # Wc
                pl.BlockSpec((1, C), lambda i: (0, 0)),        # bc
            ],
            out_specs=pl.BlockSpec((tile, C), lambda i: (i, 0)),
        ),
        compiler_params=pltpu.CompilerParams(
            dimension_semantics=("parallel",),  # lets v7x shard rows over 2 TCs
            vmem_limit_bytes=32 * 1024 * 1024,  # safe on v5e/v6e/v7x
        ),
    )(x_p, wab, bab, wc_arg, bc_row)

    if n_pad != N:
        a_out = a_out[:N]
    return a_out, x


def _reference(x, wa, ba, wb, bb, wc, bc):
    a = jnp.tanh(x @ wa + ba)
    b = jax.nn.sigmoid(x @ wb + bb)
    return (a * b) @ wc + bc


if __name__ == "__main__":
    # Small shapes consistent with the module (L features -> D hidden -> C classes).
    # N deliberately NOT a multiple of the tile to exercise the padding path.
    N, L, D, C = 300, 256, 128, 1
    dtype = jnp.float32

    key = jax.random.PRNGKey(0)
    kx, kwa, kba, kwb, kbb, kwc, kbc, kwc2, kbc2 = jax.random.split(key, 9)

    x = jax.random.normal(kx, (N, L), dtype)
    # Deterministic synthetic parameters (nn.Linear-like scale).
    wa = jax.random.normal(kwa, (L, D), dtype) * (1.0 / jnp.sqrt(L))
    ba = jax.random.normal(kba, (D,), dtype) * 0.01
    wb = jax.random.normal(kwb, (L, D), dtype) * (1.0 / jnp.sqrt(L))
    bb = jax.random.normal(kbb, (D,), dtype) * 0.01
    wc = jax.random.normal(kwc, (D, C), dtype) * (1.0 / jnp.sqrt(D))
    bc = jax.random.normal(kbc, (C,), dtype) * 0.01

    A_ref = _reference(x, wa, ba.reshape(1, D), wb, bb.reshape(1, D),
                       wc, bc.reshape(1, C))

    # TODO(synk): train-time Dropout(0.25) (dropout=True) is not modeled.

    # bf16-matmul fast path (tile clamps to padded N -> single grid step).
    A, x_out = attn_net_gated(x, wa, ba, wb, bb, wc, bc,
                              tile_n=512, use_bf16=True)
    A = jax.block_until_ready(A)
    x_out = jax.block_until_ready(x_out)
    assert A.shape == (N, C)
    assert x_out.shape == (N, L)
    assert jnp.array_equal(x_out, x)
    assert jnp.allclose(A, A_ref, atol=5e-2, rtol=5e-2), (
        float(jnp.max(jnp.abs(A - A_ref))))

    # f32 path, multi-tile grid (3 grid steps over padded rows).
    A32, _ = attn_net_gated(x, wa, ba, wb, bb, wc, bc,
                            tile_n=128, use_bf16=False)
    A32 = jax.block_until_ready(A32)
    assert jnp.allclose(A32, A_ref, atol=1e-4, rtol=1e-4), (
        float(jnp.max(jnp.abs(A32 - A_ref))))

    # Multi-class fallback path (n_classes > 1 -> MXU projection).
    C2 = 4
    wc2 = jax.random.normal(kwc2, (D, C2), dtype) * (1.0 / jnp.sqrt(D))
    bc2 = jax.random.normal(kbc2, (C2,), dtype) * 0.01
    A4, _ = attn_net_gated(x, wa, ba, wb, bb, wc2, bc2,
                           tile_n=256, use_bf16=True)
    A4 = jax.block_until_ready(A4)
    A4_ref = _reference(x, wa, ba.reshape(1, D), wb, bb.reshape(1, D),
                        wc2, bc2.reshape(1, C2))
    assert A4.shape == (N, C2)
    assert jnp.allclose(A4, A4_ref, atol=5e-2, rtol=5e-2), (
        float(jnp.max(jnp.abs(A4 - A4_ref))))

    print("KERNEL_OK")
</pallas_src>

<mosaic_0001>
module attributes {stable_mosaic.version = 11 : i64} {
  func.func @_gated_kernel_c1(%arg0: i32, %arg1: memref<304x256xbf16, #tpu.memory_space<vmem>>, %arg2: memref<256x256xbf16, #tpu.memory_space<vmem>>, %arg3: memref<1x256xf32, #tpu.memory_space<vmem>>, %arg4: memref<1x128xf32, #tpu.memory_space<vmem>>, %arg5: memref<1x1xf32, #tpu.memory_space<vmem>>, %arg6: memref<304x1xf32, #tpu.memory_space<vmem>>) attributes {dimension_semantics = [#tpu.dimension_semantics<parallel>], iteration_bounds = array<i64: 1>, scalar_prefetch = 0 : i64, scratch_operands = 0 : i64, tpu.core_type = #tpu.core_type<tc>, window_params = [{transform_indices = @transform_0, window_bounds = array<i64: 304, 256>}, {pipeline_mode = #tpu.pipeline_mode<synchronous>, transform_indices = @transform_1, window_bounds = array<i64: 256, 256>}, {pipeline_mode = #tpu.pipeline_mode<synchronous>, transform_indices = @transform_2, window_bounds = array<i64: 1, 256>}, {pipeline_mode = #tpu.pipeline_mode<synchronous>, transform_indices = @transform_3, window_bounds = array<i64: 1, 128>}, {pipeline_mode = #tpu.pipeline_mode<synchronous>, transform_indices = @transform_4, window_bounds = array<i64: 1, 1>}, {transform_indices = @transform_5, window_bounds = array<i64: 304, 1>}]} {
    %c0 = arith.constant 0 : index
    %c0_0 = arith.constant 0 : index
    %0 = vector.load %arg1[%c0, %c0_0] : memref<304x256xbf16, #tpu.memory_space<vmem>>, vector<304x256xbf16>
    %c0_1 = arith.constant 0 : index
    %c0_2 = arith.constant 0 : index
    %1 = vector.load %arg2[%c0_1, %c0_2] : memref<256x256xbf16, #tpu.memory_space<vmem>>, vector<256x256xbf16>
    %cst = arith.constant dense<0.000000e+00> : vector<304x256xf32>
    %2 = tpu.matmul %0, %1, %cst {dimension_numbers = #tpu.dot_dimension_numbers<[1], [0], [0], [1], [0, 0, 1, 1], [], []>} : vector<304x256xbf16>, vector<256x256xbf16>, vector<304x256xf32> -> vector<304x256xf32>
    %c0_3 = arith.constant 0 : index
    %c0_4 = arith.constant 0 : index
    %3 = vector.load %arg3[%c0_3, %c0_4] : memref<1x256xf32, #tpu.memory_space<vmem>>, vector<1x256xf32>
    %4 = vector.broadcast %3 : vector<1x256xf32> to vector<304x256xf32>
    %5 = arith.addf %2, %4 : vector<304x256xf32>
    %6 = vector.extract_strided_slice %5 {offsets = [0, 0], sizes = [304, 128], strides = [1, 1]} : vector<304x256xf32> to vector<304x128xf32>
    %7 = math.tanh %6 : vector<304x128xf32>
    %8 = vector.extract_strided_slice %5 {offsets = [0, 128], sizes = [304, 128], strides = [1, 1]} : vector<304x256xf32> to vector<304x128xf32>
    %9 = arith.negf %8 : vector<304x128xf32>
    %10 = math.exp %9 : vector<304x128xf32>
    %cst_5 = arith.constant 1.000000e+00 : f32
    %11 = vector.broadcast %cst_5 : f32 to vector<304x128xf32>
    %12 = arith.addf %11, %10 : vector<304x128xf32>
    %13 = arith.divf %11, %12 : vector<304x128xf32>
    %14 = arith.mulf %7, %13 : vector<304x128xf32>
    %c0_6 = arith.constant 0 : index
    %c0_7 = arith.constant 0 : index
    %15 = vector.load %arg4[%c0_6, %c0_7] : memref<1x128xf32, #tpu.memory_space<vmem>>, vector<1x128xf32>
    %16 = vector.broadcast %15 : vector<1x128xf32> to vector<304x128xf32>
    %17 = arith.mulf %14, %16 : vector<304x128xf32>
    %cst_8 = arith.constant dense<0.000000e+00> : vector<304xf32>
    %18 = vector.multi_reduction <add>, %17, %cst_8 [1] : vector<304x128xf32> to vector<304xf32>
    %19 = vector.shape_cast %18 : vector<304xf32> to vector<304x1xf32>
    %c0_9 = arith.constant 0 : index
    %c0_10 = arith.constant 0 : index
    %20 = vector.load %arg5[%c0_9, %c0_10] : memref<1x1xf32, #tpu.memory_space<vmem>>, vector<1x1xf32>
    %21 = vector.broadcast %20 : vector<1x1xf32> to vector<304x1xf32>
    %22 = arith.addf %19, %21 : vector<304x1xf32>
    %c0_11 = arith.constant 0 : index
    %c0_12 = arith.constant 0 : index
    %23 = vector.load %arg6[%c0_11, %c0_12] : memref<304x1xf32, #tpu.memory_space<vmem>>, vector<304x1xf32>
    tpu.vector_store %arg6[%c0_11, %c0_12], %22 {strides = array<i32>} : memref<304x1xf32, #tpu.memory_space<vmem>>, vector<304x1xf32>,
    return
  }
  func.func @transform_0(%arg0: i32) -> (i32, i32) {
    %c0_i32 = arith.constant 0 : i32
    %c0_i32_0 = arith.constant 0 : i32
    return %arg0, %c0_i32 : i32, i32
  }
  func.func @transform_1(%arg0: i32) -> (i32, i32) {
    %c0_i32 = arith.constant 0 : i32
    %c0_i32_0 = arith.constant 0 : i32
    %c0_i32_1 = arith.constant 0 : i32
    return %c0_i32, %c0_i32_0 : i32, i32
  }
  func.func @transform_2(%arg0: i32) -> (i32, i32) {
    %c0_i32 = arith.constant 0 : i32
    %c0_i32_0 = arith.constant 0 : i32
    %c0_i32_1 = arith.constant 0 : i32
    return %c0_i32, %c0_i32_0 : i32, i32
  }
  func.func @transform_3(%arg0: i32) -> (i32, i32) {
    %c0_i32 = arith.constant 0 : i32
    %c0_i32_0 = arith.constant 0 : i32
    %c0_i32_1 = arith.constant 0 : i32
    return %c0_i32, %c0_i32_0 : i32, i32
  }
  func.func @transform_4(%arg0: i32) -> (i32, i32) {
    %c0_i32 = arith.constant 0 : i32
    %c0_i32_0 = arith.constant 0 : i32
    %c0_i32_1 = arith.constant 0 : i32
    return %c0_i32, %c0_i32_0 : i32, i32
  }
  func.func @transform_5(%arg0: i32) -> (i32, i32) {
    %c0_i32 = arith.constant 0 : i32
    %c0_i32_0 = arith.constant 0 : i32
    return %arg0, %c0_i32 : i32, i32
  }
}

</mosaic_0001>

<llo_original>
// kernel: tpu_custom_call.1
$region0: #{tpu_custom_call.1}
  #allocation0 [shape = 'u32[]', space=smem, size = 0x4, offset = 0x4, fixed_abs, tag = 'smem constant byte address 0x4 - core index']
  #allocation1 [shape = 'u32[144,128]{1,0:T(1,128)}', space=vmem, size = 0x12000, scoped, tag = 'internal scratch']
  #allocation2 [shape = 'f32[1,1]{1,0:T(1,128)S(1)}', space=vmem, size = 0x200, scoped, tag = 'scoped memory for tpu_custom_call.1']
  %s0 = inlined_call_operand.hbm [shape: bf16[304,256], index: 0, kind: input, shape index: {}]
  %s1 = inlined_call_operand.hbm [shape: bf16[256,256], index: 1, kind: input, shape index: {}]
  %s2 = inlined_call_operand.vmem [shape: f32[1,256], index: 2, kind: input, shape index: {}]
  %s3 = inlined_call_operand.vmem [shape: f32[1,128], index: 3, kind: input, shape index: {}]
  %s4 = inlined_call_operand.<no memory space> [shape: f32[1,1], index: 4, kind: input, shape index: {}]
  %s5 = inlined_call_operand.vmem [shape: f32[304,1], index: 5, kind: output, shape index: {}]
  %s6 = sld [smem:[#allocation0]]
  $region38: #{tpu_custom_call.1} parent=0
    _
  %s8 = ssub.s32 1, %s6
  %s9 = scalar_select 0, %s8, %s6
  %v10 = vstv %s4
  %11 = vst [vmem:[#allocation2] sm:$0x1] %v10
  $region1: #{tpu_custom_call.1} parent=0
    #allocation3 [shape = 'u8[155648]{0}', space=vmem, size = 0x26000, scoped, tag = 'input window, operand 0, single buffered']
    #allocation4 [shape = 's32[1]{0}', space=sflag, size = 0x4, scoped, tag = 'scoped memory for tpu_custom_call.1']
    #allocation5 [shape = 'u8[131072]{0}', space=vmem, size = 0x20000, scoped, tag = 'input window, operand 1, single buffered']
    #allocation6 [shape = 's32[1]{0}', space=sflag, size = 0x4, scoped, tag = 'scoped memory for tpu_custom_call.1']
    %12 = vsyncpa [#allocation4], 0
    %13 = vsyncpa [#allocation6], 0
    // Predicated region
    $region2: #{tpu_custom_call.1} parent=1 // pred_check
      _
    $region3: #{tpu_custom_call.1} parent=1 // pred_check_branch
      %15 = sbr.rel (0) target = $region5
    $region4: #{tpu_custom_call.1} parent=1 // pred_region
      %s17 = ssub.s32 4864, 4864
      %18 = vsyncadd [#allocation4], %s17
      %s19 = sshll.u32 [#allocation3], 4
      %s20 = int_to_ptr.vmem [resolvable:$true] %s19
      %25 = dma.hbm_to_vmem [thread:$0]  %s0, 4864, %s20, [#allocation4], 128, 128, 8
    $region5: #{tpu_custom_call.1} parent=1 // pred_fallthru
      _
    // Predicated region
    $region6: #{tpu_custom_call.1} parent=1 // pred_check
      _
    $region7: #{tpu_custom_call.1} parent=1 // pred_check_branch
      %27 = sbr.rel (0) target = $region9
    $region8: #{tpu_custom_call.1} parent=1 // pred_region
      %s29 = ssub.s32 4096, 4096
      %30 = vsyncadd [#allocation6], %s29
      %s31 = sshll.u32 [#allocation5], 4
      %s32 = int_to_ptr.vmem [resolvable:$true] %s31
      %37 = dma.hbm_to_vmem [thread:$0]  %s1, 4096, %s32, [#allocation6], 128, 128, 8
    $region9: #{tpu_custom_call.1} parent=1 // pred_fallthru
      _
    // Predicated region
    $region10: #{tpu_custom_call.1} parent=1 // pred_check
      _
    $region11: #{tpu_custom_call.1} parent=1 // pred_check_branch
      %39 = sbr.rel (0) target = $region13
    $region12: #{tpu_custom_call.1} parent=1 // pred_region
      _
    $region13: #{tpu_custom_call.1} parent=1 // pred_fallthru
      _
    // Predicated region
    $region14: #{tpu_custom_call.1} parent=1 // pred_check
      _
    $region15: #{tpu_custom_call.1} parent=1 // pred_check_branch
      %41 = sbr.rel (0) target = $region17
    $region16: #{tpu_custom_call.1} parent=1 // pred_region
      _
    $region17: #{tpu_custom_call.1} parent=1 // pred_fallthru
      _
    // Predicated region
    $region18: #{tpu_custom_call.1} parent=1 // pred_check
      _
    $region19: #{tpu_custom_call.1} parent=1 // pred_check_branch
      %43 = sbr.rel (0) target = $region21
    $region20: #{tpu_custom_call.1} parent=1 // pred_region
      _
    $region21: #{tpu_custom_call.1} parent=1 // pred_fallthru
      _
    // Predicated region
    $region22: #{tpu_custom_call.1} parent=1 // pred_check
      _
    $region23: #{tpu_custom_call.1} parent=1 // pred_check_branch
      %45 = sbr.rel (0) target = $region25
    $region24: #{tpu_custom_call.1} parent=1 // pred_region
      %46 = dma.done [#allocation4], 4864
    $region25: #{tpu_custom_call.1} parent=1 // pred_fallthru
      _
    // Predicated region
    $region26: #{tpu_custom_call.1} parent=1 // pred_check
      _
    $region27: #{tpu_custom_call.1} parent=1 // pred_check_branch
      %48 = sbr.rel (0) target = $region29
    $region28: #{tpu_custom_call.1} parent=1 // pred_region
      %49 = dma.done [#allocation6], 4096
    $region29: #{tpu_custom_call.1} parent=1 // pred_fallthru
      _
    %v50 = vld [vmem:[#allocation3] sm:$0xff]
    %v51 = vld [vmem:[#allocation3 + $0x8] sm:$0xff]
    %v52 = vld [vmem:[#allocation3 + $0x10] sm:$0xff]
    %v53 = vld [vmem:[#allocation3 + $0x18] sm:$0xff]
    %v54 = vld [vmem:[#allocation3 + $0x20] sm:$0xff]
    %v55 = vld [vmem:[#allocation3 + $0x28] sm:$0xff]
    %v56 = vld [vmem:[#allocation3 + $0x30] sm:$0xff]
    %v57 = vld [vmem:[#allocation3 + $0x38] sm:$0xff]
    %v58 = vld [vmem:[#allocation3 + $0x40] sm:$0xff]
    %v59 = vld [vmem:[#allocation3 + $0x48] sm:$0xff]
    %v60 = vld [vmem:[#allocation3 + $0x50] sm:$0xff]
    %v61 = vld [vmem:[#allocation3 + $0x58] sm:$0xff]
    %v62 = vld [vmem:[#allocation3 + $0x60] sm:$0xff]
    %v63 = vld [vmem:[#allocation3 + $0x68] sm:$0xff]
    %v64 = vld [vmem:[#allocation3 + $0x70] sm:$0xff]
    %v65 = vld [vmem:[#allocation3 + $0x78] sm:$0xff]
    %v66 = vld [vmem:[#allocation3 + $0x80] sm:$0xff]
    %v67 = vld [vmem:[#allocation3 + $0x88] sm:$0xff]
    %v68 = vld [vmem:[#allocation3 + $0x90] sm:$0xff]
    %v69 = vld [vmem:[#allocation3 + $0x98] sm:$0xff]
    %v70 = vld [vmem:[#allocation3 + $0xa0] sm:$0xff]
    %v71 = vld [vmem:[#allocation3 + $0xa8] sm:$0xff]
    %v72 = vld [vmem:[#allocation3 + $0xb0] sm:$0xff]
    %v73 = vld [vmem:[#allocation3 + $0xb8] sm:$0xff]
    %v74 = vld [vmem:[#allocation3 + $0xc0] sm:$0xff]
    %v75 = vld [vmem:[#allocation3 + $0xc8] sm:$0xff]
    %v76 = vld [vmem:[#allocation3 + $0xd0] sm:$0xff]
    %v77 = vld [vmem:[#allocation3 + $0xd8] sm:$0xff]
    %v78 = vld [vmem:[#allocation3 + $0xe0] sm:$0xff]
    %v79 = vld [vmem:[#allocation3 + $0xe8] sm:$0xff]
    %v80 = vld [vmem:[#allocation3 + $0xf0] sm:$0xff]
    %v81 = vld [vmem:[#allocation3 + $0xf8] sm:$0xff]
    %v82 = vld [vmem:[#allocation3 + $0x100] sm:$0xff]
    %v83 = vld [vmem:[#allocation3 + $0x108] sm:$0xff]
    %v84 = vld [vmem:[#allocation3 + $0x110] sm:$0xff]
    %v85 = vld [vmem:[#allocation3 + $0x118] sm:$0xff]
    %v86 = vld [vmem:[#allocation3 + $0x120] sm:$0xff]
    %v87 = vld [vmem:[#allocation3 + $0x128] sm:$0xff]
    %v88 = vld [vmem:[#allocation5] sm:$0xff]
    %v89 = vld [vmem:[#allocation5 + $0x8] sm:$0xff]
    %v90 = vld [vmem:[#allocation5 + $0x10] sm:$0xff]
    %v91 = vld [vmem:[#allocation5 + $0x18] sm:$0xff]
    %v92 = vld [vmem:[#allocation5 + $0x20] sm:$0xff]
    %v93 = vld [vmem:[#allocation5 + $0x28] sm:$0xff]
    %v94 = vld [vmem:[#allocation5 + $0x30] sm:$0xff]
    %v95 = vld [vmem:[#allocation5 + $0x38] sm:$0xff]
    %v96 = vld [vmem:[#allocation5 + $0x40] sm:$0xff]
    %v97 = vld [vmem:[#allocation5 + $0x48] sm:$0xff]
    %v98 = vld [vmem:[#allocation5 + $0x50] sm:$0xff]
    %v99 = vld [vmem:[#allocation5 + $0x58] sm:$0xff]
    %v100 = vld [vmem:[#allocation5 + $0x60] sm:$0xff]
    %v101 = vld [vmem:[#allocation5 + $0x68] sm:$0xff]
    %v102 = vld [vmem:[#allocation5 + $0x70] sm:$0xff]
    %v103 = vld [vmem:[#allocation5 + $0x78] sm:$0xff]
    %v104 = vld [vmem:[#allocation5 + $0x80] sm:$0xff]
    %v105 = vld [vmem:[#allocation5 + $0x88] sm:$0xff]
    %v106 = vld [vmem:[#allocation5 + $0x90] sm:$0xff]
    %v107 = vld [vmem:[#allocation5 + $0x98] sm:$0xff]
    %v108 = vld [vmem:[#allocation5 + $0xa0] sm:$0xff]
    %v109 = vld [vmem:[#allocation5 + $0xa8] sm:$0xff]
    %v110 = vld [vmem:[#allocation5 + $0xb0] sm:$0xff]
    %v111 = vld [vmem:[#allocation5 + $0xb8] sm:$0xff]
    %v112 = vld [vmem:[#allocation5 + $0xc0] sm:$0xff]
    %v113 = vld [vmem:[#allocation5 + $0xc8] sm:$0xff]
    %v114 = vld [vmem:[#allocation5 + $0xd0] sm:$0xff]
    %v115 = vld [vmem:[#allocation5 + $0xd8] sm:$0xff]
    %v116 = vld [vmem:[#allocation5 + $0xe0] sm:$0xff]
    %v117 = vld [vmem:[#allocation5 + $0xe8] sm:$0xff]
    %v118 = vld [vmem:[#allocation5 + $0xf0] sm:$0xff]
    %v119 = vld [vmem:[#allocation5 + $0xf8] sm:$0xff]
    %v120 = vld [vmem:[%s2] sm:$0x3]
    %v122 = vlaneseq
    %v123 = vshrl.u32 %v122, 7
    %v124 = vsub.s32 0, %v123
    %v125 = vrot.slane %v120, %v124
    %v126 = vlaneseq
    %v127 = vshrl.u32 %v126, 7
    %v128 = vsub.s32 1, %v127
    %v129 = vrot.slane %v120, %v128
    %v170 = vunpack.c.l.b16 %v50
    %v171 = vunpack.c.h.b16 %v50
    %v172 = vunpack.c.l.b16 %v51
    %v173 = vunpack.c.h.b16 %v51
    %v174 = vunpack.c.l.b16 %v52
    %v175 = vunpack.c.h.b16 %v52
    %v176 = vunpack.c.l.b16 %v53
    %v177 = vunpack.c.h.b16 %v53
    %v178 = vunpack.c.l.b16 %v54
    %v179 = vunpack.c.h.b16 %v54
    %v180 = vunpack.c.l.b16 %v55
    %v181 = vunpack.c.h.b16 %v55
    %v182 = vunpack.c.l.b16 %v56
    %v183 = vunpack.c.h.b16 %v56
    %v184 = vunpack.c.l.b16 %v57
    %v185 = vunpack.c.h.b16 %v57
    %v186 = vunpack.c.l.b16 %v58
    %v187 = vunpack.c.h.b16 %v58
    %v188 = vunpack.c.l.b16 %v59
    %v189 = vunpack.c.h.b16 %v59
    %v190 = vunpack.c.l.b16 %v60
    %v191 = vunpack.c.h.b16 %v60
    %v192 = vunpack.c.l.b16 %v61
    %v193 = vunpack.c.h.b16 %v61
    %v194 = vunpack.c.l.b16 %v62
    %v195 = vunpack.c.h.b16 %v62
    %v196 = vunpack.c.l.b16 %v63
    %v197 = vunpack.c.h.b16 %v63
    %v198 = vunpack.c.l.b16 %v64
    %v199 = vunpack.c.h.b16 %v64
    %v200 = vunpack.c.l.b16 %v65
    %v201 = vunpack.c.h.b16 %v65
    %v202 = vunpack.c.l.b16 %v66
    %v203 = vunpack.c.h.b16 %v66
    %v204 = vunpack.c.l.b16 %v67
    %v205 = vunpack.c.h.b16 %v67
    %v206 = vunpack.c.l.b16 %v68
    %v207 = vunpack.c.h.b16 %v68
    %v208 = vunpack.c.l.b16 %v69
    %v209 = vunpack.c.h.b16 %v69
    %v210 = vunpack.c.l.b16 %v70
    %v211 = vunpack.c.h.b16 %v70
    %v212 = vunpack.c.l.b16 %v71
    %v213 = vunpack.c.h.b16 %v71
    %v214 = vunpack.c.l.b16 %v72
    %v215 = vunpack.c.h.b16 %v72
    %v216 = vunpack.c.l.b16 %v73
    %v217 = vunpack.c.h.b16 %v73
    %v218 = vunpack.c.l.b16 %v74
    %v219 = vunpack.c.h.b16 %v74
    %v220 = vunpack.c.l.b16 %v75
    %v221 = vunpack.c.h.b16 %v75
    %v222 = vunpack.c.l.b16 %v76
    %v223 = vunpack.c.h.b16 %v76
    %v224 = vunpack.c.l.b16 %v77
    %v225 = vunpack.c.h.b16 %v77
    %v226 = vunpack.c.l.b16 %v78
    %v227 = vunpack.c.h.b16 %v78
    %v228 = vunpack.c.l.b16 %v79
    %v229 = vunpack.c.h.b16 %v79
    %v230 = vunpack.c.l.b16 %v80
    %v231 = vunpack.c.h.b16 %v80
    %v232 = vunpack.c.l.b16 %v81
    %v233 = vunpack.c.h.b16 %v81
    %v234 = vunpack.c.l.b16 %v82
    %v235 = vunpack.c.h.b16 %v82
    %v236 = vunpack.c.l.b16 %v83
    %v237 = vunpack.c.h.b16 %v83
    %v238 = vunpack.c.l.b16 %v84
    %v239 = vunpack.c.h.b16 %v84
    %v240 = vunpack.c.l.b16 %v85
    %v241 = vunpack.c.h.b16 %v85
    %v242 = vunpack.c.l.b16 %v86
    %v243 = vunpack.c.h.b16 %v86
    %v244 = vunpack.c.l.b16 %v87
    %v245 = vunpack.c.h.b16 %v87
    %v246 = vpack.c.b16 %v172, %v170
    %v247 = vpack.c.b16 %v173, %v171
    %v248 = vpack.c.b16 %v176, %v174
    %v249 = vpack.c.b16 %v177, %v175
    %v250 = vpack.c.b16 %v180, %v178
    %v251 = vpack.c.b16 %v181, %v179
    %v252 = vpack.c.b16 %v184, %v182
    %v253 = vpack.c.b16 %v185, %v183
    %v254 = vpack.c.b16 %v188, %v186
    %v255 = vpack.c.b16 %v189, %v187
    %v256 = vpack.c.b16 %v192, %v190
    %v257 = vpack.c.b16 %v193, %v191
    %v258 = vpack.c.b16 %v196, %v194
    %v259 = vpack.c.b16 %v197, %v195
    %v260 = vpack.c.b16 %v200, %v198
    %v261 = vpack.c.b16 %v201, %v199
    %v262 = vpack.c.b16 %v204, %v202
    %v263 = vpack.c.b16 %v205, %v203
    %v264 = vpack.c.b16 %v208, %v206
    %v265 = vpack.c.b16 %v209, %v207
    %v266 = vpack.c.b16 %v212, %v210
    %v267 = vpack.c.b16 %v213, %v211
    %v268 = vpack.c.b16 %v216, %v214
    %v269 = vpack.c.b16 %v217, %v215
    %v270 = vpack.c.b16 %v220, %v218
    %v271 = vpack.c.b16 %v221, %v219
    %v272 = vpack.c.b16 %v224, %v222
    %v273 = vpack.c.b16 %v225, %v223
    %v274 = vpack.c.b16 %v228, %v226
    %v275 = vpack.c.b16 %v229, %v227
    %v276 = vpack.c.b16 %v232, %v230
    %v277 = vpack.c.b16 %v233, %v231
    %v278 = vpack.c.b16 %v236, %v234
    %v279 = vpack.c.b16 %v237, %v235
    %v280 = vpack.c.b16 %v240, %v238
    %v281 = vpack.c.b16 %v241, %v239
    %v282 = vpack.c.b16 %v244, %v242
    %v283 = vpack.c.b16 %v245, %v243
    %v354 = vunpack.c.l.b16 %v88
    %v355 = vunpack.c.h.b16 %v88
    %v356 = vunpack.c.l.b16 %v89
    %v357 = vunpack.c.h.b16 %v89
    %v358 = vunpack.c.l.b16 %v90
    %v359 = vunpack.c.h.b16 %v90
    %v360 = vunpack.c.l.b16 %v91
    %v361 = vunpack.c.h.b16 %v91
    %v362 = vunpack.c.l.b16 %v92
    %v363 = vunpack.c.h.b16 %v92
    %v364 = vunpack.c.l.b16 %v93
    %v365 = vunpack.c.h.b16 %v93
    %v366 = vunpack.c.l.b16 %v94
    %v367 = vunpack.c.h.b16 %v94
    %v368 = vunpack.c.l.b16 %v95
    %v369 = vunpack.c.h.b16 %v95
    %v370 = vunpack.c.l.b16 %v96
    %v371 = vunpack.c.h.b16 %v96
    %v372 = vunpack.c.l.b16 %v97
    %v373 = vunpack.c.h.b16 %v97
    %v374 = vunpack.c.l.b16 %v98
    %v375 = vunpack.c.h.b16 %v98
    %v376 = vunpack.c.l.b16 %v99
    %v377 = vunpack.c.h.b16 %v99
    %v378 = vunpack.c.l.b16 %v100
    %v379 = vunpack.c.h.b16 %v100
    %v380 = vunpack.c.l.b16 %v101
    %v381 = vunpack.c.h.b16 %v101
    %v382 = vunpack.c.l.b16 %v102
    %v383 = vunpack.c.h.b16 %v102
    %v384 = vunpack.c.l.b16 %v103
    %v385 = vunpack.c.h.b16 %v103
    %v386 = vunpack.c.l.b16 %v104
    %v387 = vunpack.c.h.b16 %v104
    %v388 = vunpack.c.l.b16 %v105
    %v389 = vunpack.c.h.b16 %v105
    %v390 = vunpack.c.l.b16 %v106
    %v391 = vunpack.c.h.b16 %v106
    %v392 = vunpack.c.l.b16 %v107
    %v393 = vunpack.c.h.b16 %v107
    %v394 = vunpack.c.l.b16 %v108
    %v395 = vunpack.c.h.b16 %v108
    %v396 = vunpack.c.l.b16 %v109
    %v397 = vunpack.c.h.b16 %v109
    %v398 = vunpack.c.l.b16 %v110
    %v399 = vunpack.c.h.b16 %v110
    %v400 = vunpack.c.l.b16 %v111
    %v401 = vunpack.c.h.b16 %v111
    %v402 = vunpack.c.l.b16 %v112
    %v403 = vunpack.c.h.b16 %v112
    %v404 = vunpack.c.l.b16 %v113
    %v405 = vunpack.c.h.b16 %v113
    %v406 = vunpack.c.l.b16 %v114
    %v407 = vunpack.c.h.b16 %v114
    %v408 = vunpack.c.l.b16 %v115
    %v409 = vunpack.c.h.b16 %v115
    %v410 = vunpack.c.l.b16 %v116
    %v411 = vunpack.c.h.b16 %v116
    %v412 = vunpack.c.l.b16 %v117
    %v413 = vunpack.c.h.b16 %v117
    %v414 = vunpack.c.l.b16 %v118
    %v415 = vunpack.c.h.b16 %v118
    %v416 = vunpack.c.l.b16 %v119
    %v417 = vunpack.c.h.b16 %v119
    %v418 = vpack.c.b16 %v356, %v354
    %v419 = vpack.c.b16 %v357, %v355
    %v420 = vpack.c.b16 %v360, %v358
    %v421 = vpack.c.b16 %v361, %v359
    %v422 = vpack.c.b16 %v364, %v362
    %v423 = vpack.c.b16 %v365, %v363
    %v424 = vpack.c.b16 %v368, %v366
    %v425 = vpack.c.b16 %v369, %v367
    %v426 = vpack.c.b16 %v372, %v370
    %v427 = vpack.c.b16 %v373, %v371
    %v428 = vpack.c.b16 %v376, %v374
    %v429 = vpack.c.b16 %v377, %v375
    %v430 = vpack.c.b16 %v380, %v378
    %v431 = vpack.c.b16 %v381, %v379
    %v432 = vpack.c.b16 %v384, %v382
    %v433 = vpack.c.b16 %v385, %v383
    %v434 = vpack.c.b16 %v388, %v386
    %v435 = vpack.c.b16 %v389, %v387
    %v436 = vpack.c.b16 %v392, %v390
    %v437 = vpack.c.b16 %v393, %v391
    %v438 = vpack.c.b16 %v396, %v394
    %v439 = vpack.c.b16 %v397, %v395
    %v440 = vpack.c.b16 %v400, %v398
    %v441 = vpack.c.b16 %v401, %v399
    %v442 = vpack.c.b16 %v404, %v402
    %v443 = vpack.c.b16 %v405, %v403
    %v444 = vpack.c.b16 %v408, %v406
    %v445 = vpack.c.b16 %v409, %v407
    %v446 = vpack.c.b16 %v412, %v410
    %v447 = vpack.c.b16 %v413, %v411
    %v448 = vpack.c.b16 %v416, %v414
    %v449 = vpack.c.b16 %v417, %v415
    %482 = vmatprep.subr.bf16.mxu0 %v419
    %483 = vmatpush1.bf16.msra.mxu0 %v418
    %484 = vmatprep.subr.bf16.mxu0 %v421
    %485 = vmatpush1.bf16.msra.mxu0 %v420
    %486 = vmatprep.subr.bf16.mxu0 %v423
    %487 = vmatpush1.bf16.msra.mxu0 %v422
    %488 = vmatprep.subr.bf16.mxu0 %v425
    %489 = vmatpush1.bf16.msra.mxu0 %v424
    %490 = vmatprep.subr.bf16.mxu0 %v427
    %491 = vmatpush1.bf16.msra.mxu0 %v426
    %492 = vmatprep.subr.bf16.mxu0 %v429
    %493 = vmatpush1.bf16.msra.mxu0 %v428
    %494 = vmatprep.subr.bf16.mxu0 %v431
    %495 = vmatpush1.bf16.msra.mxu0 %v430
    %496 = vmatprep.subr.bf16.mxu0 %v433
    %497 = vmatpush1.bf16.msra.mxu0 %v432
    %498 = vmatprep.subr.bf16.mxu0 %v435
    %499 = vmatpush1.bf16.msra.mxu0 %v434
    %500 = vmatprep.subr.bf16.mxu0 %v437
    %501 = vmatpush1.bf16.msra.mxu0 %v436
    %502 = vmatprep.subr.bf16.mxu0 %v439
    %503 = vmatpush1.bf16.msra.mxu0 %v438
    %504 = vmatprep.subr.bf16.mxu0 %v441
    %505 = vmatpush1.bf16.msra.mxu0 %v440
    %506 = vmatprep.subr.bf16.mxu0 %v443
    %507 = vmatpush1.bf16.msra.mxu0 %v442
    %508 = vmatprep.subr.bf16.mxu0 %v445
    %509 = vmatpush1.bf16.msra.mxu0 %v444
    %510 = vmatprep.subr.bf16.mxu0 %v447
    %511 = vmatpush1.bf16.msra.mxu0 %v446
    %512 = vmatprep.subr.bf16.mxu0 %v449
    %513 = vmatpush1.bf16.msra.mxu0 %v448
    %514 = vmatprep.mubr.bf16.mxu0 %v247
    %515 = vmatmul.mubr.bf16.gmra.mrb[0].mxu0 %v246
    %v516 = vpop.f32.mrb[0].mxu0
    %v517 = vadd.f32 %v125, %v516
    %v518 = vpop.f32.mrb[0].mxu0
    %v519 = vadd.f32 %v129, %v518
    %v520 = vpop.f32.mrb[0].mxu0
    %v521 = vadd.f32 %v125, %v520
    %v522 = vpop.f32.mrb[0].mxu0
    %v523 = vadd.f32 %v129, %v522
    %524 = vmatprep.mubr.bf16.mxu0 %v249
    %525 = vmatmul.mubr.bf16.gmra.mrb[0].mxu0 %v248
    %v526 = vpop.f32.mrb[0].mxu0
    %v527 = vadd.f32 %v125, %v526
    %v528 = vpop.f32.mrb[0].mxu0
    %v529 = vadd.f32 %v129, %v528
    %v530 = vpop.f32.mrb[0].mxu0
    %v531 = vadd.f32 %v125, %v530
    %v532 = vpop.f32.mrb[0].mxu0
    %v533 = vadd.f32 %v129, %v532
    %534 = vmatprep.mubr.bf16.mxu0 %v251
    %535 = vmatmul.mubr.bf16.gmra.mrb[0].mxu0 %v250
    %v536 = vpop.f32.mrb[0].mxu0
    %v537 = vadd.f32 %v125, %v536
    %v538 = vpop.f32.mrb[0].mxu0
    %v539 = vadd.f32 %v129, %v538
    %v540 = vpop.f32.mrb[0].mxu0
    %v541 = vadd.f32 %v125, %v540
    %v542 = vpop.f32.mrb[0].mxu0
    %v543 = vadd.f32 %v129, %v542
    %544 = vmatprep.mubr.bf16.mxu0 %v253
    %545 = vmatmul.mubr.bf16.gmra.mrb[0].mxu0 %v252
    %v546 = vpop.f32.mrb[0].mxu0
    %v547 = vadd.f32 %v125, %v546
    %v548 = vpop.f32.mrb[0].mxu0
    %v549 = vadd.f32 %v129, %v548
    %v550 = vpop.f32.mrb[0].mxu0
    %v551 = vadd.f32 %v125, %v550
    %v552 = vpop.f32.mrb[0].mxu0
    %v553 = vadd.f32 %v129, %v552
    %554 = vmatprep.mubr.bf16.mxu0 %v255
    %555 = vmatmul.mubr.bf16.gmra.mrb[0].mxu0 %v254
    %v556 = vpop.f32.mrb[0].mxu0
    %v557 = vadd.f32 %v125, %v556
    %v558 = vpop.f32.mrb[0].mxu0
    %v559 = vadd.f32 %v129, %v558
    %v560 = vpop.f32.mrb[0].mxu0
    %v561 = vadd.f32 %v125, %v560
    %v562 = vpop.f32.mrb[0].mxu0
    %v563 = vadd.f32 %v129, %v562
    %564 = vmatprep.mubr.bf16.mxu0 %v257
    %565 = vmatmul.mubr.bf16.gmra.mrb[0].mxu0 %v256
    %v566 = vpop.f32.mrb[0].mxu0
    %v567 = vadd.f32 %v125, %v566
    %v568 = vpop.f32.mrb[0].mxu0
    %v569 = vadd.f32 %v129, %v568
    %v570 = vpop.f32.mrb[0].mxu0
    %v571 = vadd.f32 %v125, %v570
    %v572 = vpop.f32.mrb[0].mxu0
    %v573 = vadd.f32 %v129, %v572
    %574 = vmatprep.mubr.bf16.mxu0 %v259
    %575 = vmatmul.mubr.bf16.gmra.mrb[0].mxu0 %v258
    %v576 = vpop.f32.mrb[0].mxu0
    %v577 = vadd.f32 %v125, %v576
    %v578 = vpop.f32.mrb[0].mxu0
    %v579 = vadd.f32 %v129, %v578
    %v580 = vpop.f32.mrb[0].mxu0
    %v581 = vadd.f32 %v125, %v580
    %v582 = vpop.f32.mrb[0].mxu0
    %v583 = vadd.f32 %v129, %v582
    %584 = vmatprep.mubr.bf16.mxu0 %v261
    %585 = vmatmul.mubr.bf16.gmra.mrb[0].mxu0 %v260
    %v586 = vpop.f32.mrb[0].mxu0
    %v587 = vadd.f32 %v125, %v586
    %v588 = vpop.f32.mrb[0].mxu0
    %v589 = vadd.f32 %v129, %v588
    %v590 = vpop.f32.mrb[0].mxu0
    %v591 = vadd.f32 %v125, %v590
    %v592 = vpop.f32.mrb[0].mxu0
    %v593 = vadd.f32 %v129, %v592
    %594 = vmatprep.mubr.bf16.mxu0 %v263
    %595 = vmatmul.mubr.bf16.gmra.mrb[0].mxu0 %v262
    %v596 = vpop.f32.mrb[0].mxu0
    %v597 = vadd.f32 %v125, %v596
    %v598 = vpop.f32.mrb[0].mxu0
    %v599 = vadd.f32 %v129, %v598
    %v600 = vpop.f32.mrb[0].mxu0
    %v601 = vadd.f32 %v125, %v600
    %v602 = vpop.f32.mrb[0].mxu0
    %v603 = vadd.f32 %v129, %v602
    %604 = vmatprep.mubr.bf16.mxu0 %v265
    %605 = vmatmul.mubr.bf16.gmra.mrb[0].mxu0 %v264
    %v606 = vpop.f32.mrb[0].mxu0
    %v607 = vadd.f32 %v125, %v606
    %v608 = vpop.f32.mrb[0].mxu0
    %v609 = vadd.f32 %v129, %v608
    %v610 = vpop.f32.mrb[0].mxu0
    %v611 = vadd.f32 %v125, %v610
    %v612 = vpop.f32.mrb[0].mxu0
    %v613 = vadd.f32 %v129, %v612
    %614 = vmatprep.mubr.bf16.mxu0 %v267
    %615 = vmatmul.mubr.bf16.gmra.mrb[0].mxu0 %v266
    %v616 = vpop.f32.mrb[0].mxu0
    %v617 = vadd.f32 %v125, %v616
    %v618 = vpop.f32.mrb[0].mxu0
    %v619 = vadd.f32 %v129, %v618
    %v620 = vpop.f32.mrb[0].mxu0
    %v621 = vadd.f32 %v125, %v620
    %v622 = vpop.f32.mrb[0].mxu0
    %v623 = vadd.f32 %v129, %v622
    %624 = vmatprep.mubr.bf16.mxu0 %v269
    %625 = vmatmul.mubr.bf16.gmra.mrb[0].mxu0 %v268
    %v626 = vpop.f32.mrb[0].mxu0
    %v627 = vadd.f32 %v125, %v626
    %v628 = vpop.f32.mrb[0].mxu0
    %v629 = vadd.f32 %v129, %v628
    %v630 = vpop.f32.mrb[0].mxu0
    %v631 = vadd.f32 %v125, %v630
    %v632 = vpop.f32.mrb[0].mxu0
    %v633 = vadd.f32 %v129, %v632
    %634 = vmatprep.mubr.bf16.mxu0 %v271
    %635 = vmatmul.mubr.bf16.gmra.mrb[0].mxu0 %v270
    %v636 = vpop.f32.mrb[0].mxu0
    %v637 = vadd.f32 %v125, %v636
    %v638 = vpop.f32.mrb[0].mxu0
    %v639 = vadd.f32 %v129, %v638
    %v640 = vpop.f32.mrb[0].mxu0
    %v641 = vadd.f32 %v125, %v640
    %v642 = vpop.f32.mrb[0].mxu0
    %v643 = vadd.f32 %v129, %v642
    %644 = vmatprep.mubr.bf16.mxu0 %v273
    %645 = vmatmul.mubr.bf16.gmra.mrb[0].mxu0 %v272
    %v646 = vpop.f32.mrb[0].mxu0
    %v647 = vadd.f32 %v125, %v646
    %v648 = vpop.f32.mrb[0].mxu0
    %v649 = vadd.f32 %v129, %v648
    %v650 = vpop.f32.mrb[0].mxu0
    %v651 = vadd.f32 %v125, %v650
    %v652 = vpop.f32.mrb[0].mxu0
    %v653 = vadd.f32 %v129, %v652
    %654 = vmatprep.mubr.bf16.mxu0 %v275
    %655 = vmatmul.mubr.bf16.gmra.mrb[0].mxu0 %v274
    %v656 = vpop.f32.mrb[0].mxu0
    %v657 = vadd.f32 %v125, %v656
    %v658 = vpop.f32.mrb[0].mxu0
    %v659 = vadd.f32 %v129, %v658
    %v660 = vpop.f32.mrb[0].mxu0
    %v661 = vadd.f32 %v125, %v660
    %v662 = vpop.f32.mrb[0].mxu0
    %v663 = vadd.f32 %v129, %v662
    %664 = vmatprep.mubr.bf16.mxu0 %v277
    %665 = vmatmul.mubr.bf16.gmra.mrb[0].mxu0 %v276
    %v666 = vpop.f32.mrb[0].mxu0
    %v667 = vadd.f32 %v125, %v666
    %v668 = vpop.f32.mrb[0].mxu0
    %v669 = vadd.f32 %v129, %v668
    %v670 = vpop.f32.mrb[0].mxu0
    %v671 = vadd.f32 %v125, %v670
    %v672 = vpop.f32.mrb[0].mxu0
    %v673 = vadd.f32 %v129, %v672
    %674 = vmatprep.mubr.bf16.mxu0 %v279
    %675 = vmatmul.mubr.bf16.gmra.mrb[0].mxu0 %v278
    %v676 = vpop.f32.mrb[0].mxu0
    %v677 = vadd.f32 %v125, %v676
    %v678 = vpop.f32.mrb[0].mxu0
    %v679 = vadd.f32 %v129, %v678
    %v680 = vpop.f32.mrb[0].mxu0
    %v681 = vadd.f32 %v125, %v680
    %v682 = vpop.f32.mrb[0].mxu0
    %v683 = vadd.f32 %v129, %v682
    %684 = vmatprep.mubr.bf16.mxu0 %v281
    %685 = vmatmul.mubr.bf16.gmra.mrb[0].mxu0 %v280
    %v686 = vpop.f32.mrb[0].mxu0
    %v687 = vadd.f32 %v125, %v686
    %v688 = vpop.f32.mrb[0].mxu0
    %v689 = vadd.f32 %v129, %v688
    %v690 = vpop.f32.mrb[0].mxu0
    %v691 = vadd.f32 %v125, %v690
    %v692 = vpop.f32.mrb[0].mxu0
    %v693 = vadd.f32 %v129, %v692
    %694 = vmatprep.mubr.bf16.mxu0 %v283
    %695 = vmatmul.mubr.bf16.gmra.mrb[0].mxu0 %v282
    %v696 = vpop.f32.mrb[0].mxu0
    %v697 = vadd.f32 %v125, %v696
    %v698 = vpop.f32.mrb[0].mxu0
    %v699 = vadd.f32 %v129, %v698
    %v700 = vpop.f32.mrb[0].mxu0
    %v701 = vadd.f32 %v125, %v700
    %v702 = vpop.f32.mrb[0].mxu0
    %v703 = vadd.f32 %v129, %v702
    %704 = vdwg.mxu0
    %v705 = vtanh.pop %v517
    %v706 = vtanh.pop %v521
    %v707 = vtanh.pop %v527
    %v708 = vtanh.pop %v531
    %v709 = vtanh.pop %v537
    %v710 = vtanh.pop %v541
    %v711 = vtanh.pop %v547
    %v712 = vtanh.pop %v551
    %v713 = vtanh.pop %v557
    %v714 = vtanh.pop %v561
    %v715 = vtanh.pop %v567
    %v716 = vtanh.pop %v571
    %v717 = vtanh.pop %v577
    %v718 = vtanh.pop %v581
    %v719 = vtanh.pop %v587
    %v720 = vtanh.pop %v591
    %v721 = vtanh.pop %v597
    %v722 = vtanh.pop %v601
    %v723 = vtanh.pop %v607
    %v724 = vtanh.pop %v611
    %v725 = vtanh.pop %v617
    %v726 = vtanh.pop %v621
    %v727 = vtanh.pop %v627
    %v728 = vtanh.pop %v631
    %v729 = vtanh.pop %v637
    %v730 = vtanh.pop %v641
    %v731 = vtanh.pop %v647
    %v732 = vtanh.pop %v651
    %v733 = vtanh.pop %v657
    %v734 = vtanh.pop %v661
    %v735 = vtanh.pop %v667
    %v736 = vtanh.pop %v671
    %v737 = vtanh.pop %v677
    %v738 = vtanh.pop %v681
    %v739 = vtanh.pop %v687
    %v740 = vtanh.pop %v691
    %v741 = vtanh.pop %v697
    %v742 = vtanh.pop %v701
    %v743 = vxor.u32 %v519, 2147483648
    %v744 = vxor.u32 %v523, 2147483648
    %v745 = vxor.u32 %v529, 2147483648
    %v746 = vxor.u32 %v533, 2147483648
    %v747 = vxor.u32 %v539, 2147483648
    %v748 = vxor.u32 %v543, 2147483648
    %v749 = vxor.u32 %v549, 2147483648
    %v750 = vxor.u32 %v553, 2147483648
    %v751 = vxor.u32 %v559, 2147483648
    %v752 = vxor.u32 %v563, 2147483648
    %v753 = vxor.u32 %v569, 2147483648
    %v754 = vxor.u32 %v573, 2147483648
    %v755 = vxor.u32 %v579, 2147483648
    %v756 = vxor.u32 %v583, 2147483648
    %v757 = vxor.u32 %v589, 2147483648
    %v758 = vxor.u32 %v593, 2147483648
    %v759 = vxor.u32 %v599, 2147483648
    %v760 = vxor.u32 %v603, 2147483648
    %v761 = vxor.u32 %v609, 2147483648
    %v762 = vxor.u32 %v613, 2147483648
    %v763 = vxor.u32 %v619, 2147483648
    %v764 = vxor.u32 %v623, 2147483648
    %v765 = vxor.u32 %v629, 2147483648
    %v766 = vxor.u32 %v633, 2147483648
    %v767 = vxor.u32 %v639, 2147483648
    %v768 = vxor.u32 %v643, 2147483648
    %v769 = vxor.u32 %v649, 2147483648
    %v770 = vxor.u32 %v653, 2147483648
    %v771 = vxor.u32 %v659, 2147483648
    %v772 = vxor.u32 %v663, 2147483648
    %v773 = vxor.u32 %v669, 2147483648
    %v774 = vxor.u32 %v673, 2147483648
    %v775 = vxor.u32 %v679, 2147483648
    %v776 = vxor.u32 %v683, 2147483648
    %v777 = vxor.u32 %v689, 2147483648
    %v778 = vxor.u32 %v693, 2147483648
    %v779 = vxor.u32 %v699, 2147483648
    %v780 = vxor.u32 %v703, 2147483648
    %v781 = vmul.f32 %v743, 1.442695
    %v782 = vpow.pop %v781
    %v783 = vmul.f32 %v744, 1.442695
    %v784 = vpow.pop %v783
    %v785 = vmul.f32 %v745, 1.442695
    %v786 = vpow.pop %v785
    %v787 = vmul.f32 %v746, 1.442695
    %v788 = vpow.pop %v787
    %v789 = vmul.f32 %v747, 1.442695
    %v790 = vpow.pop %v789
    %v791 = vmul.f32 %v748, 1.442695
    %v792 = vpow.pop %v791
    %v793 = vmul.f32 %v749, 1.442695
    %v794 = vpow.pop %v793
    %v795 = vmul.f32 %v750, 1.442695
    %v796 = vpow.pop %v795
    %v797 = vmul.f32 %v751, 1.442695
    %v798 = vpow.pop %v797
    %v799 = vmul.f32 %v752, 1.442695
    %v800 = vpow.pop %v799
    %v801 = vmul.f32 %v753, 1.442695
    %v802 = vpow.pop %v801
    %v803 = vmul.f32 %v754, 1.442695
    %v804 = vpow.pop %v803
    %v805 = vmul.f32 %v755, 1.442695
    %v806 = vpow.pop %v805
    %v807 = vmul.f32 %v756, 1.442695
    %v808 = vpow.pop %v807
    %v809 = vmul.f32 %v757, 1.442695
    %v810 = vpow.pop %v809
    %v811 = vmul.f32 %v758, 1.442695
    %v812 = vpow.pop %v811
    %v813 = vmul.f32 %v759, 1.442695
    %v814 = vpow.pop %v813
    %v815 = vmul.f32 %v760, 1.442695
    %v816 = vpow.pop %v815
    %v817 = vmul.f32 %v761, 1.442695
    %v818 = vpow.pop %v817
    %v819 = vmul.f32 %v762, 1.442695
    %v820 = vpow.pop %v819
    %v821 = vmul.f32 %v763, 1.442695
    %v822 = vpow.pop %v821
    %v823 = vmul.f32 %v764, 1.442695
    %v824 = vpow.pop %v823
    %v825 = vmul.f32 %v765, 1.442695
    %v826 = vpow.pop %v825
    %v827 = vmul.f32 %v766, 1.442695
    %v828 = vpow.pop %v827
    %v829 = vmul.f32 %v767, 1.442695
    %v830 = vpow.pop %v829
    %v831 = vmul.f32 %v768, 1.442695
    %v832 = vpow.pop %v831
    %v833 = vmul.f32 %v769, 1.442695
    %v834 = vpow.pop %v833
    %v835 = vmul.f32 %v770, 1.442695
    %v836 = vpow.pop %v835
    %v837 = vmul.f32 %v771, 1.442695
    %v838 = vpow.pop %v837
    %v839 = vmul.f32 %v772, 1.442695
    %v840 = vpow.pop %v839
    %v841 = vmul.f32 %v773, 1.442695
    %v842 = vpow.pop %v841
    %v843 = vmul.f32 %v774, 1.442695
    %v844 = vpow.pop %v843
    %v845 = vmul.f32 %v775, 1.442695
    %v846 = vpow.pop %v845
    %v847 = vmul.f32 %v776, 1.442695
    %v848 = vpow.pop %v847
    %v849 = vmul.f32 %v777, 1.442695
    %v850 = vpow.pop %v849
    %v851 = vmul.f32 %v778, 1.442695
    %v852 = vpow.pop %v851
    %v853 = vmul.f32 %v779, 1.442695
    %v854 = vpow.pop %v853
    %v855 = vmul.f32 %v780, 1.442695
    %v856 = vpow.pop %v855
    %v857 = vadd.f32 %v782, 1.0
    %v858 = vadd.f32 %v784, 1.0
    %v859 = vadd.f32 %v786, 1.0
    %v860 = vadd.f32 %v788, 1.0
    %v861 = vadd.f32 %v790, 1.0
    %v862 = vadd.f32 %v792, 1.0
    %v863 = vadd.f32 %v794, 1.0
    %v864 = vadd.f32 %v796, 1.0
    %v865 = vadd.f32 %v798, 1.0
    %v866 = vadd.f32 %v800, 1.0
    %v867 = vadd.f32 %v802, 1.0
    %v868 = vadd.f32 %v804, 1.0
    %v869 = vadd.f32 %v806, 1.0
    %v870 = vadd.f32 %v808, 1.0
    %v871 = vadd.f32 %v810, 1.0
    %v872 = vadd.f32 %v812, 1.0
    %v873 = vadd.f32 %v814, 1.0
    %v874 = vadd.f32 %v816, 1.0
    %v875 = vadd.f32 %v818, 1.0
    %v876 = vadd.f32 %v820, 1.0
    %v877 = vadd.f32 %v822, 1.0
    %v878 = vadd.f32 %v824, 1.0
    %v879 = vadd.f32 %v826, 1.0
    %v880 = vadd.f32 %v828, 1.0
    %v881 = vadd.f32 %v830, 1.0
    %v882 = vadd.f32 %v832, 1.0
    %v883 = vadd.f32 %v834, 1.0
    %v884 = vadd.f32 %v836, 1.0
    %v885 = vadd.f32 %v838, 1.0
    %v886 = vadd.f32 %v840, 1.0
    %v887 = vadd.f32 %v842, 1.0
    %v888 = vadd.f32 %v844, 1.0
    %v889 = vadd.f32 %v846, 1.0
    %v890 = vadd.f32 %v848, 1.0
    %v891 = vadd.f32 %v850, 1.0
    %v892 = vadd.f32 %v852, 1.0
    %v893 = vadd.f32 %v854, 1.0
    %v894 = vadd.f32 %v856, 1.0
    %v895 = vrcp.pop %v857
    %v896 = vmul.f32 1.0, %v895
    %v897 = vrcp.pop %v858
    %v898 = vmul.f32 1.0, %v897
    %v899 = vrcp.pop %v859
    %v900 = vmul.f32 1.0, %v899
    %v901 = vrcp.pop %v860
    %v902 = vmul.f32 1.0, %v901
    %v903 = vrcp.pop %v861
    %v904 = vmul.f32 1.0, %v903
    %v905 = vrcp.pop %v862
    %v906 = vmul.f32 1.0, %v905
    %v907 = vrcp.pop %v863
    %v908 = vmul.f32 1.0, %v907
    %v909 = vrcp.pop %v864
    %v910 = vmul.f32 1.0, %v909
    %v911 = vrcp.pop %v865
    %v912 = vmul.f32 1.0, %v911
    %v913 = vrcp.pop %v866
    %v914 = vmul.f32 1.0, %v913
    %v915 = vrcp.pop %v867
    %v916 = vmul.f32 1.0, %v915
    %v917 = vrcp.pop %v868
    %v918 = vmul.f32 1.0, %v917
    %v919 = vrcp.pop %v869
    %v920 = vmul.f32 1.0, %v919
    %v921 = vrcp.pop %v870
    %v922 = vmul.f32 1.0, %v921
    %v923 = vrcp.pop %v871
    %v924 = vmul.f32 1.0, %v923
    %v925 = vrcp.pop %v872
    %v926 = vmul.f32 1.0, %v925
    %v927 = vrcp.pop %v873
    %v928 = vmul.f32 1.0, %v927
    %v929 = vrcp.pop %v874
    %v930 = vmul.f32 1.0, %v929
    %v931 = vrcp.pop %v875
    %v932 = vmul.f32 1.0, %v931
    %v933 = vrcp.pop %v876
    %v934 = vmul.f32 1.0, %v933
    %v935 = vrcp.pop %v877
    %v936 = vmul.f32 1.0, %v935
    %v937 = vrcp.pop %v878
    %v938 = vmul.f32 1.0, %v937
    %v939 = vrcp.pop %v879
    %v940 = vmul.f32 1.0, %v939
    %v941 = vrcp.pop %v880
    %v942 = vmul.f32 1.0, %v941
    %v943 = vrcp.pop %v881
    %v944 = vmul.f32 1.0, %v943
    %v945 = vrcp.pop %v882
    %v946 = vmul.f32 1.0, %v945
    %v947 = vrcp.pop %v883
    %v948 = vmul.f32 1.0, %v947
    %v949 = vrcp.pop %v884
    %v950 = vmul.f32 1.0, %v949
    %v951 = vrcp.pop %v885
    %v952 = vmul.f32 1.0, %v951
    %v953 = vrcp.pop %v886
    %v954 = vmul.f32 1.0, %v953
    %v955 = vrcp.pop %v887
    %v956 = vmul.f32 1.0, %v955
    %v957 = vrcp.pop %v888
    %v958 = vmul.f32 1.0, %v957
    %v959 = vrcp.pop %v889
    %v960 = vmul.f32 1.0, %v959
    %v961 = vrcp.pop %v890
    %v962 = vmul.f32 1.0, %v961
    %v963 = vrcp.pop %v891
    %v964 = vmul.f32 1.0, %v963
    %v965 = vrcp.pop %v892
    %v966 = vmul.f32 1.0, %v965
    %v967 = vrcp.pop %v893
    %v968 = vmul.f32 1.0, %v967
    %v969 = vrcp.pop %v894
    %v970 = vmul.f32 1.0, %v969
    %v971 = vmul.f32 %v705, %v896
    %v972 = vmul.f32 %v706, %v898
    %v973 = vmul.f32 %v707, %v900
    %v974 = vmul.f32 %v708, %v902
    %v975 = vmul.f32 %v709, %v904
    %v976 = vmul.f32 %v710, %v906
    %v977 = vmul.f32 %v711, %v908
    %v978 = vmul.f32 %v712, %v910
    %v979 = vmul.f32 %v713, %v912
    %v980 = vmul.f32 %v714, %v914
    %v981 = vmul.f32 %v715, %v916
    %v982 = vmul.f32 %v716, %v918
    %v983 = vmul.f32 %v717, %v920
    %v984 = vmul.f32 %v718, %v922
    %v985 = vmul.f32 %v719, %v924
    %v986 = vmul.f32 %v720, %v926
    %v987 = vmul.f32 %v721, %v928
    %v988 = vmul.f32 %v722, %v930
    %v989 = vmul.f32 %v723, %v932
    %v990 = vmul.f32 %v724, %v934
    %v991 = vmul.f32 %v725, %v936
    %v992 = vmul.f32 %v726, %v938
    %v993 = vmul.f32 %v727, %v940
    %v994 = vmul.f32 %v728, %v942
    %v995 = vmul.f32 %v729, %v944
    %v996 = vmul.f32 %v730, %v946
    %v997 = vmul.f32 %v731, %v948
    %v998 = vmul.f32 %v732, %v950
    %v999 = vmul.f32 %v733, %v952
    %v1000 = vmul.f32 %v734, %v954
    %v1001 = vmul.f32 %v735, %v956
    %v1002 = vmul.f32 %v736, %v958
    %v1003 = vmul.f32 %v737, %v960
    %v1004 = vmul.f32 %v738, %v962
    %v1005 = vmul.f32 %v739, %v964
    %v1006 = vmul.f32 %v740, %v966
    %v1007 = vmul.f32 %v741, %v968
    %v1008 = vmul.f32 %v742, %v970
    %v1009 = vld [vmem:[%s3] sm:$0x1]
    %v1011 = vlaneseq
    %v1012 = vshrl.u32 %v1011, 7
    %v1013 = vsub.s32 0, %v1012
    %v1014 = vrot.slane %v1009, %v1013
    %v1016 = vmul.f32 %v971, %v1014
    %v1017 = vmul.f32 %v972, %v1014
    %v1018 = vmul.f32 %v973, %v1014
    %v1019 = vmul.f32 %v974, %v1014
    %v1020 = vmul.f32 %v975, %v1014
    %v1021 = vmul.f32 %v976, %v1014
    %v1022 = vmul.f32 %v977, %v1014
    %v1023 = vmul.f32 %v978, %v1014
    %v1024 = vmul.f32 %v979, %v1014
    %v1025 = vmul.f32 %v980, %v1014
    %v1026 = vmul.f32 %v981, %v1014
    %v1027 = vmul.f32 %v982, %v1014
    %v1028 = vmul.f32 %v983, %v1014
    %v1029 = vmul.f32 %v984, %v1014
    %v1030 = vmul.f32 %v985, %v1014
    %v1031 = vmul.f32 %v986, %v1014
    %v1032 = vmul.f32 %v987, %v1014
    %v1033 = vmul.f32 %v988, %v1014
    %v1034 = vmul.f32 %v989, %v1014
    %v1035 = vmul.f32 %v990, %v1014
    %v1036 = vmul.f32 %v991, %v1014
    %v1037 = vmul.f32 %v992, %v1014
    %v1038 = vmul.f32 %v993, %v1014
    %v1039 = vmul.f32 %v994, %v1014
    %v1040 = vmul.f32 %v995, %v1014
    %v1041 = vmul.f32 %v996, %v1014
    %v1042 = vmul.f32 %v997, %v1014
    %v1043 = vmul.f32 %v998, %v1014
    %v1044 = vmul.f32 %v999, %v1014
    %v1045 = vmul.f32 %v1000, %v1014
    %v1046 = vmul.f32 %v1001, %v1014
    %v1047 = vmul.f32 %v1002, %v1014
    %v1048 = vmul.f32 %v1003, %v1014
    %v1049 = vmul.f32 %v1004, %v1014
    %v1050 = vmul.f32 %v1005, %v1014
    %v1051 = vmul.f32 %v1006, %v1014
    %v1052 = vmul.f32 %v1007, %v1014
    %v1053 = vmul.f32 %v1008, %v1014
    %1054 = vadd.xlane.f32.xlu0 %v1016
    %v1055 = vpop.xlane.xlu0 %1054
    %1056 = vadd.xlane.f32.xlu0 %v1017
    %v1057 = vpop.xlane.xlu0 %1056
    %1058 = vadd.xlane.f32.xlu0 %v1018
    %v1059 = vpop.xlane.xlu0 %1058
    %1060 = vadd.xlane.f32.xlu0 %v1019
    %v1061 = vpop.xlane.xlu0 %1060
    %1062 = vadd.xlane.f32.xlu0 %v1020
    %v1063 = vpop.xlane.xlu0 %1062
    %1064 = vadd.xlane.f32.xlu0 %v1021
    %v1065 = vpop.xlane.xlu0 %1064
    %1066 = vadd.xlane.f32.xlu0 %v1022
    %v1067 = vpop.xlane.xlu0 %1066
    %1068 = vadd.xlane.f32.xlu0 %v1023
    %v1069 = vpop.xlane.xlu0 %1068
    %1070 = vadd.xlane.f32.xlu0 %v1024
    %v1071 = vpop.xlane.xlu0 %1070
    %1072 = vadd.xlane.f32.xlu0 %v1025
    %v1073 = vpop.xlane.xlu0 %1072
    %1074 = vadd.xlane.f32.xlu0 %v1026
    %v1075 = vpop.xlane.xlu0 %1074
    %1076 = vadd.xlane.f32.xlu0 %v1027
    %v1077 = vpop.xlane.xlu0 %1076
    %1078 = vadd.xlane.f32.xlu0 %v1028
    %v1079 = vpop.xlane.xlu0 %1078
    %1080 = vadd.xlane.f32.xlu0 %v1029
    %v1081 = vpop.xlane.xlu0 %1080
    %1082 = vadd.xlane.f32.xlu0 %v1030
    %v1083 = vpop.xlane.xlu0 %1082
    %1084 = vadd.xlane.f32.xlu0 %v1031
    %v1085 = vpop.xlane.xlu0 %1084
    %1086 = vadd.xlane.f32.xlu0 %v1032
    %v1087 = vpop.xlane.xlu0 %1086
    %1088 = vadd.xlane.f32.xlu0 %v1033
    %v1089 = vpop.xlane.xlu0 %1088
    %1090 = vadd.xlane.f32.xlu0 %v1034
    %v1091 = vpop.xlane.xlu0 %1090
    %1092 = vadd.xlane.f32.xlu0 %v1035
    %v1093 = vpop.xlane.xlu0 %1092
    %1094 = vadd.xlane.f32.xlu0 %v1036
    %v1095 = vpop.xlane.xlu0 %1094
    %1096 = vadd.xlane.f32.xlu0 %v1037
    %v1097 = vpop.xlane.xlu0 %1096
    %1098 = vadd.xlane.f32.xlu0 %v1038
    %v1099 = vpop.xlane.xlu0 %1098
    %1100 = vadd.xlane.f32.xlu0 %v1039
    %v1101 = vpop.xlane.xlu0 %1100
    %1102 = vadd.xlane.f32.xlu0 %v1040
    %v1103 = vpop.xlane.xlu0 %1102
    %1104 = vadd.xlane.f32.xlu0 %v1041
    %v1105 = vpop.xlane.xlu0 %1104
    %1106 = vadd.xlane.f32.xlu0 %v1042
    %v1107 = vpop.xlane.xlu0 %1106
    %1108 = vadd.xlane.f32.xlu0 %v1043
    %v1109 = vpop.xlane.xlu0 %1108
    %1110 = vadd.xlane.f32.xlu0 %v1044
    %v1111 = vpop.xlane.xlu0 %1110
    %1112 = vadd.xlane.f32.xlu0 %v1045
    %v1113 = vpop.xlane.xlu0 %1112
    %1114 = vadd.xlane.f32.xlu0 %v1046
    %v1115 = vpop.xlane.xlu0 %1114
    %1116 = vadd.xlane.f32.xlu0 %v1047
    %v1117 = vpop.xlane.xlu0 %1116
    %1118 = vadd.xlane.f32.xlu0 %v1048
    %v1119 = vpop.xlane.xlu0 %1118
    %1120 = vadd.xlane.f32.xlu0 %v1049
    %v1121 = vpop.xlane.xlu0 %1120
    %1122 = vadd.xlane.f32.xlu0 %v1050
    %v1123 = vpop.xlane.xlu0 %1122
    %1124 = vadd.xlane.f32.xlu0 %v1051
    %v1125 = vpop.xlane.xlu0 %1124
    %1126 = vadd.xlane.f32.xlu0 %v1052
    %v1127 = vpop.xlane.xlu0 %1126
    %1128 = vadd.xlane.f32.xlu0 %v1053
    %v1129 = vpop.xlane.xlu0 %1128
    %v1130 = vld [vmem:[#allocation2] sm:$0x1]
    %v1132 = vlaneseq
    %v1133 = vshrl.u32 %v1132, 7
    %v1134 = vsub.s32 0, %v1133
    %v1135 = vrot.slane %v1130, %v1134
    %v1137 = vadd.f32 %v1055, %v1135
    %v1138 = vadd.f32 %v1057, %v1135
    %v1139 = vadd.f32 %v1059, %v1135
    %v1140 = vadd.f32 %v1061, %v1135
    %v1141 = vadd.f32 %v1063, %v1135
    %v1142 = vadd.f32 %v1065, %v1135
    %v1143 = vadd.f32 %v1067, %v1135
    %v1144 = vadd.f32 %v1069, %v1135
    %v1145 = vadd.f32 %v1071, %v1135
    %v1146 = vadd.f32 %v1073, %v1135
    %v1147 = vadd.f32 %v1075, %v1135
    %v1148 = vadd.f32 %v1077, %v1135
    %v1149 = vadd.f32 %v1079, %v1135
    %v1150 = vadd.f32 %v1081, %v1135
    %v1151 = vadd.f32 %v1083, %v1135
    %v1152 = vadd.f32 %v1085, %v1135
    %v1153 = vadd.f32 %v1087, %v1135
    %v1154 = vadd.f32 %v1089, %v1135
    %v1155 = vadd.f32 %v1091, %v1135
    %v1156 = vadd.f32 %v1093, %v1135
    %v1157 = vadd.f32 %v1095, %v1135
    %v1158 = vadd.f32 %v1097, %v1135
    %v1159 = vadd.f32 %v1099, %v1135
    %v1160 = vadd.f32 %v1101, %v1135
    %v1161 = vadd.f32 %v1103, %v1135
    %v1162 = vadd.f32 %v1105, %v1135
    %v1163 = vadd.f32 %v1107, %v1135
    %v1164 = vadd.f32 %v1109, %v1135
    %v1165 = vadd.f32 %v1111, %v1135
    %v1166 = vadd.f32 %v1113, %v1135
    %v1167 = vadd.f32 %v1115, %v1135
    %v1168 = vadd.f32 %v1117, %v1135
    %v1169 = vadd.f32 %v1119, %v1135
    %v1170 = vadd.f32 %v1121, %v1135
    %v1171 = vadd.f32 %v1123, %v1135
    %v1172 = vadd.f32 %v1125, %v1135
    %v1173 = vadd.f32 %v1127, %v1135
    %v1174 = vadd.f32 %v1129, %v1135
    %vm1175 = vcmask 7168
    %1176 = vst.msk [vmem:[%s5] sm:$0xff] %vm1175, %v1137
    %1177 = vst.msk [vmem:[%s5 + $0x8] sm:$0xff] %vm1175, %v1138
    %1178 = vst.msk [vmem:[%s5 + $0x10] sm:$0xff] %vm1175, %v1139
    %1179 = vst.msk [vmem:[%s5 + $0x18] sm:$0xff] %vm1175, %v1140
    %1180 = vst.msk [vmem:[%s5 + $0x20] sm:$0xff] %vm1175, %v1141
    %1181 = vst.msk [vmem:[%s5 + $0x28] sm:$0xff] %vm1175, %v1142
    %1182 = vst.msk [vmem:[%s5 + $0x30] sm:$0xff] %vm1175, %v1143
    %1183 = vst.msk [vmem:[%s5 + $0x38] sm:$0xff] %vm1175, %v1144
    %1184 = vst.msk [vmem:[%s5 + $0x40] sm:$0xff] %vm1175, %v1145
    %1185 = vst.msk [vmem:[%s5 + $0x48] sm:$0xff] %vm1175, %v1146
    %1186 = vst.msk [vmem:[%s5 + $0x50] sm:$0xff] %vm1175, %v1147
    %1187 = vst.msk [vmem:[%s5 + $0x58] sm:$0xff] %vm1175, %v1148
    %1188 = vst.msk [vmem:[%s5 + $0x60] sm:$0xff] %vm1175, %v1149
    %1189 = vst.msk [vmem:[%s5 + $0x68] sm:$0xff] %vm1175, %v1150
    %1190 = vst.msk [vmem:[%s5 + $0x70] sm:$0xff] %vm1175, %v1151
    %1191 = vst.msk [vmem:[%s5 + $0x78] sm:$0xff] %vm1175, %v1152
    %1192 = vst.msk [vmem:[%s5 + $0x80] sm:$0xff] %vm1175, %v1153
    %1193 = vst.msk [vmem:[%s5 + $0x88] sm:$0xff] %vm1175, %v1154
    %1194 = vst.msk [vmem:[%s5 + $0x90] sm:$0xff] %vm1175, %v1155
    %1195 = vst.msk [vmem:[%s5 + $0x98] sm:$0xff] %vm1175, %v1156
    %1196 = vst.msk [vmem:[%s5 + $0xa0] sm:$0xff] %vm1175, %v1157
    %1197 = vst.msk [vmem:[%s5 + $0xa8] sm:$0xff] %vm1175, %v1158
    %1198 = vst.msk [vmem:[%s5 + $0xb0] sm:$0xff] %vm1175, %v1159
    %1199 = vst.msk [vmem:[%s5 + $0xb8] sm:$0xff] %vm1175, %v1160
    %1200 = vst.msk [vmem:[%s5 + $0xc0] sm:$0xff] %vm1175, %v1161
    %1201 = vst.msk [vmem:[%s5 + $0xc8] sm:$0xff] %vm1175, %v1162
    %1202 = vst.msk [vmem:[%s5 + $0xd0] sm:$0xff] %vm1175, %v1163
    %1203 = vst.msk [vmem:[%s5 + $0xd8] sm:$0xff] %vm1175, %v1164
    %1204 = vst.msk [vmem:[%s5 + $0xe0] sm:$0xff] %vm1175, %v1165
    %1205 = vst.msk [vmem:[%s5 + $0xe8] sm:$0xff] %vm1175, %v1166
    %1206 = vst.msk [vmem:[%s5 + $0xf0] sm:$0xff] %vm1175, %v1167
    %1207 = vst.msk [vmem:[%s5 + $0xf8] sm:$0xff] %vm1175, %v1168
    %1208 = vst.msk [vmem:[%s5 + $0x100] sm:$0xff] %vm1175, %v1169
    %1209 = vst.msk [vmem:[%s5 + $0x108] sm:$0xff] %vm1175, %v1170
    %1210 = vst.msk [vmem:[%s5 + $0x110] sm:$0xff] %vm1175, %v1171
    %1211 = vst.msk [vmem:[%s5 + $0x118] sm:$0xff] %vm1175, %v1172
    %1212 = vst.msk [vmem:[%s5 + $0x120] sm:$0xff] %vm1175, %v1173
    %1213 = vst.msk [vmem:[%s5 + $0x128] sm:$0xff] %vm1175, %v1174
    // Predicated region
    $region30: #{tpu_custom_call.1} parent=1 // pred_check
      _
    $region31: #{tpu_custom_call.1} parent=1 // pred_check_branch
      %1215 = sbr.rel (0) target = $region33
    $region32: #{tpu_custom_call.1} parent=1 // pred_region
      _
    $region33: #{tpu_custom_call.1} parent=1 // pred_fallthru
      _
    // Predicated region
    $region34: #{tpu_custom_call.1} parent=1 // pred_check
      _
    $region35: #{tpu_custom_call.1} parent=1 // pred_check_branch
      %1217 = sbr.rel (0) target = $region37
    $region36: #{tpu_custom_call.1} parent=1 // pred_region
      _
    $region37: #{tpu_custom_call.1} parent=1 // pred_fallthru
      _
    %1218 = vsyncpa [#allocation4], 1
    %1219 = vsyncpa [#allocation6], 1

</llo_original>
